<compile_context>
chip_gen: v7x
topology: tpu7x:2x2x1
jax: 0.10.0
libtpu: 0.0.40
codegen_flags: <defaults>
</compile_context>

<pallas_src>
import functools
from dataclasses import dataclass

import numpy as np
import jax
import jax.numpy as jnp
from jax.experimental import pallas as pl
from jax.experimental.pallas import tpu as pltpu


def _round_up(x, m):
    return (x + m - 1) // m * m


# ----------------------------------------------------------------------------
# Per-generation configuration (bf16 inner math + VMEM budget)
# ----------------------------------------------------------------------------
def _tpu_config():
    kind = ""
    try:
        kind = jax.devices()[0].device_kind.lower()
    except Exception:
        pass
    is_v7 = ("v7" in kind) or ("7x" in kind)
    is_v6 = "v6" in kind
    # v5e has no bf16 VPU/EUP -> keep the weight-generation math in f32 there.
    use_bf16 = is_v6 or is_v7
    if is_v7:
        vmem = 48 * 1024 * 1024          # v7x: 64 MiB physical VMEM per TensorCore
    elif is_v6 or ("v5" in kind) or ("v4" in kind):
        vmem = 64 * 1024 * 1024          # 128 MiB physical VMEM
    else:
        vmem = 32 * 1024 * 1024          # conservative default
    return use_bf16, vmem


USE_BF16_WEIGHTS, RENDER_VMEM_LIMIT = _tpu_config()


# ----------------------------------------------------------------------------
# Encoder kernel: per-pixel MLP -> raw gaussian parameters (pixels on lanes)
# ----------------------------------------------------------------------------
FIN = 5       # rgb (3) + normalized pixel uv (2)
HID = 32
POUT = 6      # depth_t, opacity, color(3), sigma
POUT_PAD = 8  # padded to 8 sublanes for lane/sublane-aligned tiles


def encoder_mlp_kernel(x_ref, w1_ref, b1_ref, w2_ref, b2_ref, sc_ref, of_ref, o_ref):
    x = x_ref[...]                                                     # [FIN, PT]
    h = jnp.dot(w1_ref[...], x, preferred_element_type=jnp.float32) + b1_ref[...]
    h = jnp.maximum(h, 0.0)                                            # [HID, PT]
    raw = jnp.dot(w2_ref[...], h, preferred_element_type=jnp.float32) + b2_ref[...]
    s = jax.nn.sigmoid(raw)                                            # [8, PT]
    # fused per-row affine epilogue; scale/offset are constant [8,1] inputs:
    #   rows 0..4: sigmoid          (depth_t, opacity, r, g, b)
    #   row  5   : 0.5 + 2*sigmoid  (world-space std)
    #   rows 6..7: 0                (padding)
    o_ref[...] = s * sc_ref[...] + of_ref[...]


def encoder_mlp(feats_t, w1t, b1, w2t, b2, tile_px):
    fin, n_pad = feats_t.shape
    assert n_pad % tile_px == 0
    scale = jnp.array([[1.0], [1.0], [1.0], [1.0], [1.0], [2.0], [0.0], [0.0]],
                      jnp.float32)
    offset = jnp.array([[0.0], [0.0], [0.0], [0.0], [0.0], [0.5], [0.0], [0.0]],
                       jnp.float32)
    const = lambda i: (0, 0)
    return pl.pallas_call(
        encoder_mlp_kernel,
        out_shape=jax.ShapeDtypeStruct((POUT_PAD, n_pad), jnp.float32),
        grid_spec=pltpu.PrefetchScalarGridSpec(
            num_scalar_prefetch=0,
            grid=(n_pad // tile_px,),
            in_specs=[
                pl.BlockSpec((FIN, tile_px), lambda i: (0, i)),
                pl.BlockSpec((HID, FIN), const),
                pl.BlockSpec((HID, 1), const),
                pl.BlockSpec((POUT_PAD, HID), const),
                pl.BlockSpec((POUT_PAD, 1), const),
                pl.BlockSpec((POUT_PAD, 1), const),
                pl.BlockSpec((POUT_PAD, 1), const),
            ],
            out_specs=pl.BlockSpec((POUT_PAD, tile_px), lambda i: (0, i)),
        ),
        compiler_params=pltpu.CompilerParams(
            dimension_semantics=("parallel",),
            vmem_limit_bytes=32 * 1024 * 1024,
        ),
    )(feats_t, w1t, b1, w2t, b2, scale, offset)


# ----------------------------------------------------------------------------
# Decoder kernel: order-independent gaussian splatting reduction with chunk culling
#   grid = (view, pixel_tile, gaussian_chunk)   -- reduction axis last
#   acc[8, PT] += gm[8, GC] @ w[GC, PT]          -- pixels on lanes
# A scalar-prefetched reachability table (SMEM) lets whole (tile, chunk) pairs be
# skipped when the chunk's 3-sigma screen bbox cannot touch the pixel tile.
# ----------------------------------------------------------------------------
GC_MAX = 1024   # gaussians per chunk (128-aligned)
PT_MAX = 2048   # pixels per tile


def render_kernel(mask_ref, pix_ref, gw_ref, gm_ref, out_ref, acc_ref, *, use_bf16):
    ci = pl.program_id(2)

    @pl.when(ci == 0)
    def _init():
        acc_ref[...] = jnp.zeros_like(acc_ref)

    v = pl.program_id(0)
    p = pl.program_id(1)
    n_p = pl.num_programs(1)
    n_c = pl.num_programs(2)
    active = mask_ref[(v * n_p + p) * n_c + ci] != 0

    @pl.when(active)
    def _accumulate():
        px = pix_ref[0:1, :]                       # [1, PT] pixel center x
        py = pix_ref[1:2, :]                       # [1, PT] pixel center y
        gw = gw_ref[0]                             # [GC, 4] per-gaussian attrs
        gx = gw[:, 0:1]                            # projected center x     [GC, 1]
        gy = gw[:, 1:2]                            # projected center y     [GC, 1]
        ga = gw[:, 2:3]                            # -0.5 * inverse pix var [GC, 1]
        gl = gw[:, 3:4]                            # ln(opacity*valid)      [GC, 1]

        # squared distance on the VPU in f32 (coordinate precision), opacity and the
        # -0.5/var factor are pre-folded into the exponent by decode().
        dx = gx - px                               # [GC, PT]
        dy = gy - py
        d2 = dx * dx + dy * dy
        arg = d2 * ga + gl                         # [GC, PT] f32

        if use_bf16:
            # v6e/v7x: bf16 EUP exp produces the MXU operand directly (no cast pass)
            w16 = jnp.exp(arg.astype(jnp.bfloat16))
        else:
            # v5e: f32 EUP exp, single cast to the bf16 MXU operand
            w16 = jnp.exp(arg).astype(jnp.bfloat16)

        gm16 = gm_ref[0]                           # [8, GC] bf16, pre-cast in decode()
        acc_ref[...] += jnp.dot(gm16, w16, preferred_element_type=jnp.float32)  # [8, PT]

    @pl.when(ci == pl.num_programs(2) - 1)
    def _finalize():
        acc = acc_ref[...]
        wsum = jnp.maximum(acc[4:5, :], 1e-6)      # clamp: no blow-up on empty pixels
        inv = pl.reciprocal(wsum, approx=False)    # exact; runs once per pixel tile
        out_ref[0] = acc * inv                     # lane-dense [8, PT] store


def render_views(pix_t, gw, gm16, mask_flat, pt, gc):
    nv, g_pad, _ = gw.shape
    hw_pad = pix_t.shape[1]
    assert hw_pad % pt == 0 and g_pad % gc == 0

    work = float(nv) * hw_pad * g_pad
    cost = pl.CostEstimate(
        flops=int(work * (6 + 2 * 8)),
        transcendentals=int(work),
        bytes_accessed=int(4 * pix_t.size + 4 * gw.size + 2 * gm16.size
                           + 4 * nv * 8 * hw_pad),
    )

    kernel = functools.partial(render_kernel, use_bf16=USE_BF16_WEIGHTS)

    out = pl.pallas_call(
        kernel,
        out_shape=jax.ShapeDtypeStruct((nv, 8, hw_pad), jnp.float32),
        grid_spec=pltpu.PrefetchScalarGridSpec(
            num_scalar_prefetch=1,
            grid=(nv, hw_pad // pt, g_pad // gc),
            in_specs=[
                # TODO(synk): gw keeps a lane dim of 4 (padded to 128 lanes in VMEM);
                # acceptable off the critical path, repack lane-dense if GC grows >2048.
                pl.BlockSpec((2, pt), lambda v, p, c, m: (0, p)),
                pl.BlockSpec((1, gc, 4), lambda v, p, c, m: (v, c, 0)),
                pl.BlockSpec((1, 8, gc), lambda v, p, c, m: (v, 0, c)),
            ],
            out_specs=pl.BlockSpec((1, 8, pt), lambda v, p, c, m: (v, 0, p)),
            scratch_shapes=[pltpu.VMEM((8, pt), jnp.float32)],
        ),
        compiler_params=pltpu.CompilerParams(
            dimension_semantics=("parallel", "parallel", "arbitrary"),
            vmem_limit_bytes=RENDER_VMEM_LIMIT,
        ),
        cost_estimate=cost,
    )(mask_flat, pix_t, gw, gm16)
    return out


# ----------------------------------------------------------------------------
# Gaussians container (mirrors the torch Gaussians fields)
# ----------------------------------------------------------------------------
@dataclass
class Gaussians:
    means: jnp.ndarray          # [B, G, 3]
    covariances: jnp.ndarray    # [B, G, 3, 3]
    harmonics: jnp.ndarray      # [B, G, 3, 1]  (DC only)
    opacities: jnp.ndarray      # [B, G]


# ----------------------------------------------------------------------------
# Encoder glue: pair of context views -> pixel-aligned Gaussians
# ----------------------------------------------------------------------------
def encode_pair(pair, enc_params):
    w1t, b1, w2t, b2 = enc_params
    imgs = pair['image']                                   # [B, 2, 3, H, W]
    B, Vp, _, H, W = imgs.shape
    N = B * Vp * H * W

    ys, xs = jnp.meshgrid(jnp.arange(H, dtype=jnp.float32),
                          jnp.arange(W, dtype=jnp.float32), indexing='ij')
    u = (xs + 0.5) / W
    v = (ys + 0.5) / H
    uv = jnp.broadcast_to(jnp.stack([u, v], 0)[None, None], (B, Vp, 2, H, W))

    feats = jnp.concatenate([imgs, uv], axis=2)            # [B, 2, FIN, H, W]
    feats_t = jnp.transpose(feats, (2, 0, 1, 3, 4)).reshape(FIN, N).astype(jnp.float32)

    tile_px = min(8192, _round_up(N, 128))
    n_pad = _round_up(N, tile_px)
    if n_pad != N:
        feats_t = jnp.pad(feats_t, ((0, 0), (0, n_pad - N)))

    out = encoder_mlp(feats_t, w1t, b1, w2t, b2, tile_px)[:, :N]   # [8, N]
    out = out.reshape(POUT_PAD, B, Vp, H, W)

    depth_t = out[0]                                       # [B, 2, H, W]
    opac = out[1]
    color = jnp.transpose(out[2:5], (1, 2, 3, 4, 0))       # [B, 2, H, W, 3]
    sigma = out[5]

    near = pair['near'][:, :, None, None]
    far = pair['far'][:, :, None, None]
    depth = near + (far - near) * depth_t                  # [B, 2, H, W]

    # Unproject pixels to world space with (normalized) intrinsics + c2w extrinsics.
    k_inv = jnp.linalg.inv(pair['intrinsics'])             # [B, 2, 3, 3]
    ndc = jnp.stack([u, v, jnp.ones_like(u)], -1)          # [H, W, 3]
    dirs = jnp.einsum('bvij,hwj->bvhwi', k_inv, ndc)       # [B, 2, H, W, 3]
    p_cam = dirs * depth[..., None]
    c2w = pair['extrinsics']                               # [B, 2, 4, 4]
    means = jnp.einsum('bvij,bvhwj->bvhwi', c2w[:, :, :3, :3], p_cam) \
        + c2w[:, :, None, None, :3, 3]

    G = Vp * H * W
    means = means.reshape(B, G, 3)
    # TODO(synk): full anisotropic covariances / higher-order SH of the real encoder are
    # reduced to isotropic covariances and DC harmonics here.
    covariances = (sigma.reshape(B, G) ** 2)[..., None, None] * jnp.eye(3)[None, None]
    harmonics = color.reshape(B, G, 3)[..., None]
    opacities = opac.reshape(B, G)
    return Gaussians(means, covariances, harmonics, opacities)


# ----------------------------------------------------------------------------
# Chunk-vs-pixel-tile reachability table for the render kernel (culling)
# ----------------------------------------------------------------------------
def _chunk_tile_mask(px, py, rad, op_eff, g_pad, gc, hw_pad, pt, H, W):
    """px/py/rad/op_eff: [NV, G]. Returns int32 [NV * n_pt * n_gc] flat mask."""
    NV, G = px.shape
    pad = g_pad - G
    if pad:
        px = jnp.pad(px, ((0, 0), (0, pad)))
        py = jnp.pad(py, ((0, 0), (0, pad)))
        rad = jnp.pad(rad, ((0, 0), (0, pad)))
        op_eff = jnp.pad(op_eff, ((0, 0), (0, pad)))
    n_gc = g_pad // gc
    n_pt = hw_pad // pt

    vmask = (op_eff > 0.0).reshape(NV, n_gc, gc)
    pxc = px.reshape(NV, n_gc, gc)
    pyc = py.reshape(NV, n_gc, gc)
    rc = rad.reshape(NV, n_gc, gc)
    BIG = 1e9
    xlo = jnp.min(jnp.where(vmask, pxc - rc, BIG), axis=-1)    # [NV, n_gc]
    xhi = jnp.max(jnp.where(vmask, pxc + rc, -BIG), axis=-1)
    ylo = jnp.min(jnp.where(vmask, pyc - rc, BIG), axis=-1)
    yhi = jnp.max(jnp.where(vmask, pyc + rc, -BIG), axis=-1)

    # pixel tile p covers flat (row-major) pixels [p*pt, p*pt+pt): full x-range
    # (conservative), y-range from the covered rows.
    tidx = np.arange(n_pt)
    ty0 = np.asarray((tidx * pt) // W, np.float32) + 0.5
    ty1 = np.asarray(np.minimum((tidx * pt + pt - 1) // W, H - 1), np.float32) + 0.5
    tx0, tx1 = 0.5, float(W) - 0.5
    ty0 = jnp.asarray(ty0)
    ty1 = jnp.asarray(ty1)

    ox = (xlo[:, None, :] <= tx1) & (xhi[:, None, :] >= tx0)                  # [NV,n_pt,n_gc]
    oy = (ylo[:, None, :] <= ty1[None, :, None]) & (yhi[:, None, :] >= ty0[None, :, None])
    return (ox & oy).astype(jnp.int32).reshape(-1)


# ----------------------------------------------------------------------------
# Decoder glue: project gaussians per target view, call the splatting kernel
# ----------------------------------------------------------------------------
def decode(gaussians, extrinsics, intrinsics, near, far, image_shape):
    H, W = image_shape
    B, TV = extrinsics.shape[:2]
    NV = B * TV
    G = gaussians.means.shape[1]

    # Derive the small per-gaussian quantities BEFORE any per-view expansion.
    means = gaussians.means                               # [B, G, 3]
    sigma2 = gaussians.covariances[..., 0, 0]             # [B, G] isotropic world var
    rgb = gaussians.harmonics[..., 0]                     # [B, G, 3]
    opac = gaussians.opacities                            # [B, G]

    c2w = extrinsics                                      # [B, TV, 4, 4]
    K = intrinsics                                        # [B, TV, 3, 3]
    w2c = jnp.linalg.inv(c2w)

    p_cam = jnp.einsum('btij,bgj->btgi', w2c[..., :3, :3], means) \
        + w2c[:, :, None, :3, 3]                          # [B, TV, G, 3]
    z = p_cam[..., 2]                                     # [B, TV, G]
    z_safe = jnp.maximum(z, 1e-3)
    proj = jnp.einsum('btij,btgj->btgi', K, p_cam)
    px = proj[..., 0] / z_safe * W
    py = proj[..., 1] / z_safe * H

    focal_pix = K[:, :, 0, 0][..., None] * W              # [B, TV, 1]
    sigma_pix2 = sigma2[:, None, :] * (focal_pix / z_safe) ** 2
    inv_var = 1.0 / (sigma_pix2 + 1e-6)
    a_scaled = -0.5 * inv_var                             # folded exponent coefficient
    valid = (z > 0.05).astype(jnp.float32)
    op_eff = opac[:, None, :] * valid                     # [B, TV, G]
    # log-opacity folded into the exponent; clamp so padded/invalid gaussians stay finite
    ln_op = jnp.maximum(jnp.log(jnp.maximum(op_eff, 1e-30)), -30.0)

    # weight attributes (gaussians on sublanes inside the kernel): px, py, -0.5/var, ln(op)
    gw_arr = jnp.stack([px, py, a_scaled, ln_op], axis=-1).reshape(NV, G, 4)

    # accumulation matrix: attributes on sublanes, gaussians on lanes; pre-cast bf16.
    # Invalid (behind-camera) gaussians are exactly zeroed here so the -30 clamp leaks nothing.
    rgb_bt = jnp.broadcast_to(rgb[:, None], (B, TV, G, 3))
    zeros = jnp.zeros_like(z)
    gm = jnp.stack([rgb_bt[..., 0] * valid, rgb_bt[..., 1] * valid,
                    rgb_bt[..., 2] * valid, z * valid, valid,
                    zeros, zeros, zeros], axis=2)          # [B, TV, 8, G]
    # TODO(synk): depth (z) rides the bf16 MXU operand (~0.4% rel err); split into a
    # separate f32 row if depth supervision needs tighter precision.
    gm_arr = gm.reshape(NV, 8, G).astype(jnp.bfloat16)

    # pad gaussians to a chunk multiple with zero-contribution entries
    gc = min(GC_MAX, _round_up(G, 128))
    g_pad = _round_up(G, gc)
    if g_pad != G:
        gw_arr = jnp.pad(gw_arr, ((0, 0), (0, g_pad - G), (0, 0)))
        gm_arr = jnp.pad(gm_arr, ((0, 0), (0, 0), (0, g_pad - G)))

    # pixel centers, transposed to [2, HW_pad] (pixels on lanes), padded to a tile multiple
    hw = H * W
    pt = min(PT_MAX, _round_up(hw, 128))
    hw_pad = _round_up(hw, pt)
    ys, xs = jnp.meshgrid(jnp.arange(H, dtype=jnp.float32),
                          jnp.arange(W, dtype=jnp.float32), indexing='ij')
    pix_t = jnp.stack([(xs + 0.5).reshape(-1), (ys + 0.5).reshape(-1)], axis=0)  # [2, hw]
    if hw_pad != hw:
        pix_t = jnp.pad(pix_t, ((0, 0), (0, hw_pad - hw)))

    # chunk-level culling table (3-sigma screen bbox vs pixel tile bbox)
    # TODO(synk): gaussians are not re-sorted by screen position per view; pixel-aligned
    # gaussians are already spatially coherent so chunk bboxes stay reasonably tight.
    rad = 3.0 * jnp.sqrt(sigma_pix2 + 1e-6)
    mask_flat = _chunk_tile_mask(px.reshape(NV, G), py.reshape(NV, G),
                                 rad.reshape(NV, G), op_eff.reshape(NV, G),
                                 g_pad, gc, hw_pad, pt, H, W)

    out = render_views(pix_t.astype(jnp.float32),
                       gw_arr.astype(jnp.float32),
                       gm_arr, mask_flat, pt, gc)           # [NV, 8, hw_pad]

    color = out[:, 0:3, :hw].reshape(B, TV, 3, H, W)         # already NCHW
    depth = out[:, 3, :hw].reshape(B, TV, H, W)
    # TODO(synk): weight-normalized splat (no depth ordering / transmittance) instead of
    # the CUDA alpha-compositing rasterizer of the original decoder.
    return color, depth


# ----------------------------------------------------------------------------
# PixelSplat forward orchestration (crop_size=None branch of the torch module)
# ----------------------------------------------------------------------------
class PixelSplatJAX:
    def __init__(self, enc_params):
        # enc_params in "natural" layout: w1 [FIN,HID], b1 [1,HID], w2 [HID,POUT], b2 [1,POUT]
        w1, b1, w2, b2 = enc_params
        w1t = jnp.asarray(w1).T.astype(jnp.float32)                          # [HID, FIN]
        b1t = jnp.asarray(b1).reshape(HID, 1).astype(jnp.float32)            # [HID, 1]
        w2t = jnp.zeros((POUT_PAD, HID), jnp.float32).at[:POUT].set(jnp.asarray(w2).T)
        b2t = jnp.zeros((POUT_PAD, 1), jnp.float32).at[:POUT, 0].set(
            jnp.asarray(b2).reshape(POUT))
        self.enc_params = (w1t, b1t, w2t, b2t)
        self.last_ref_gaussians = {}

    @staticmethod
    def batch_cut(batch, idx1, idx2):
        cat = lambda x: jnp.concatenate([x[:, idx1:idx1 + 1], x[:, idx2:idx2 + 1]], axis=1)
        return {
            'extrinsics': cat(batch['extrinsics']),
            'intrinsics': cat(batch['intrinsics']),
            'image': cat(batch['image']),
            'near': cat(batch['near']),
            'far': cat(batch['far']),
            'index': cat(batch['index']),
        }

    def forward(self, batch, global_step, i=5, j=5, crop_size=None):
        # TODO(synk): only the crop_size=None inference branch is implemented;
        # the crop_size branch needs the epipolar-feature-future encoder path.
        _, _, _, h, w = batch['target']['image'].shape

        index0 = np.asarray(batch['context']['index'][0])
        index_sort = np.argsort([int(s) for s in index0])
        str_current_idx = [str(int(it)) for it in index0]
        unused = set(self.last_ref_gaussians.keys()) - set(str_current_idx)
        for u in tuple(unused):
            del self.last_ref_gaussians[u]

        gaussians = None
        for k in range(len(index_sort) - 1):
            key = str_current_idx[index_sort[k]]
            if key in self.last_ref_gaussians:
                tmp_gaussians = self.last_ref_gaussians[key]
            else:
                tmp_batch = self.batch_cut(
                    batch['context'], int(index_sort[k]), int(index_sort[k + 1]))
                tmp_gaussians = encode_pair(tmp_batch, self.enc_params)
                self.last_ref_gaussians[key] = tmp_gaussians
            if gaussians is None:
                gaussians = tmp_gaussians
            else:
                gaussians = Gaussians(
                    means=jnp.concatenate([gaussians.means, tmp_gaussians.means], axis=1),
                    covariances=jnp.concatenate(
                        [gaussians.covariances, tmp_gaussians.covariances], axis=1),
                    harmonics=jnp.concatenate(
                        [gaussians.harmonics, tmp_gaussians.harmonics], axis=1),
                    opacities=jnp.concatenate(
                        [gaussians.opacities, tmp_gaussians.opacities], axis=1),
                )

        color, depth = decode(
            gaussians,
            batch['target']['extrinsics'], batch['target']['intrinsics'],
            batch['target']['near'], batch['target']['far'], (h, w))

        ret = {'rgb': color, 'depth': depth}
        target_gt = {'rgb': batch['target']['image']}
        return ret, target_gt


# ----------------------------------------------------------------------------
# Main: deterministic synthetic inputs, run once, print KERNEL_OK
# ----------------------------------------------------------------------------
if __name__ == "__main__":
    key = jax.random.PRNGKey(0)
    B, V, TV, H, W = 2, 3, 2, 16, 16

    k1, k2, k3, k4 = jax.random.split(key, 4)
    enc_params = (
        0.5 * jax.random.normal(k1, (FIN, HID), jnp.float32),
        jnp.zeros((1, HID), jnp.float32),
        0.2 * jax.random.normal(k2, (HID, POUT), jnp.float32),
        jnp.zeros((1, POUT), jnp.float32),
    )

    def c2w(tx):
        return jnp.eye(4, dtype=jnp.float32).at[0, 3].set(tx)

    ctx_extr = jnp.stack([jnp.stack([c2w(-0.2), c2w(0.0), c2w(0.2)])] * B)   # [B, V, 4, 4]
    tgt_extr = jnp.stack([jnp.stack([c2w(0.1), c2w(-0.1)])] * B)             # [B, TV, 4, 4]
    K = jnp.array([[1.0, 0.0, 0.5],
                   [0.0, 1.0, 0.5],
                   [0.0, 0.0, 1.0]], jnp.float32)
    ctx_intr = jnp.broadcast_to(K, (B, V, 3, 3))
    tgt_intr = jnp.broadcast_to(K, (B, TV, 3, 3))

    ctx_img = jax.random.uniform(k3, (B, V, 3, H, W), jnp.float32)
    tgt_img = jax.random.uniform(k4, (B, TV, 3, H, W), jnp.float32)

    batch = {
        'context': {
            'extrinsics': ctx_extr,
            'intrinsics': ctx_intr,
            'image': ctx_img,
            'near': jnp.full((B, V), 1.0, jnp.float32),
            'far': jnp.full((B, V), 6.0, jnp.float32),
            'index': jnp.array([[2, 0, 4]] * B, jnp.int32),
        },
        'target': {
            'extrinsics': tgt_extr,
            'intrinsics': tgt_intr,
            'image': tgt_img,
            'near': jnp.full((B, TV), 1.0, jnp.float32),
            'far': jnp.full((B, TV), 6.0, jnp.float32),
        },
    }

    model = PixelSplatJAX(enc_params)
    ret, target_gt = model.forward(batch, global_step=0)

    jax.block_until_ready(ret['rgb'])
    jax.block_until_ready(ret['depth'])
    assert ret['rgb'].shape == (B, TV, 3, H, W)
    assert ret['depth'].shape == (B, TV, H, W)
    assert target_gt['rgb'].shape == (B, TV, 3, H, W)
    assert bool(jnp.all(jnp.isfinite(ret['rgb'])))
    assert bool(jnp.all(jnp.isfinite(ret['depth'])))
    print("KERNEL_OK")
</pallas_src>

<mosaic_0001>
module attributes {stable_mosaic.version = 11 : i64} {
  func.func @encoder_mlp_kernel(%arg0: i32, %arg1: memref<5x1024xf32, #tpu.memory_space<vmem>>, %arg2: memref<32x5xf32, #tpu.memory_space<vmem>>, %arg3: memref<32x1xf32, #tpu.memory_space<vmem>>, %arg4: memref<8x32xf32, #tpu.memory_space<vmem>>, %arg5: memref<8x1xf32, #tpu.memory_space<vmem>>, %arg6: memref<8x1xf32, #tpu.memory_space<vmem>>, %arg7: memref<8x1xf32, #tpu.memory_space<vmem>>, %arg8: memref<8x1024xf32, #tpu.memory_space<vmem>>) attributes {dimension_semantics = [#tpu.dimension_semantics<parallel>], iteration_bounds = array<i64: 1>, scalar_prefetch = 0 : i64, scratch_operands = 0 : i64, tpu.core_type = #tpu.core_type<tc>, window_params = [{transform_indices = @transform_0, window_bounds = array<i64: 5, 1024>}, {pipeline_mode = #tpu.pipeline_mode<synchronous>, transform_indices = @transform_1, window_bounds = array<i64: 32, 5>}, {pipeline_mode = #tpu.pipeline_mode<synchronous>, transform_indices = @transform_2, window_bounds = array<i64: 32, 1>}, {pipeline_mode = #tpu.pipeline_mode<synchronous>, transform_indices = @transform_3, window_bounds = array<i64: 8, 32>}, {pipeline_mode = #tpu.pipeline_mode<synchronous>, transform_indices = @transform_4, window_bounds = array<i64: 8, 1>}, {pipeline_mode = #tpu.pipeline_mode<synchronous>, transform_indices = @transform_5, window_bounds = array<i64: 8, 1>}, {pipeline_mode = #tpu.pipeline_mode<synchronous>, transform_indices = @transform_6, window_bounds = array<i64: 8, 1>}, {transform_indices = @transform_7, window_bounds = array<i64: 8, 1024>}]} {
    %c0 = arith.constant 0 : index
    %c0_0 = arith.constant 0 : index
    %0 = vector.load %arg1[%c0, %c0_0] : memref<5x1024xf32, #tpu.memory_space<vmem>>, vector<5x1024xf32>
    %c0_1 = arith.constant 0 : index
    %c0_2 = arith.constant 0 : index
    %1 = vector.load %arg2[%c0_1, %c0_2] : memref<32x5xf32, #tpu.memory_space<vmem>>, vector<32x5xf32>
    %cst = arith.constant dense<0.000000e+00> : vector<32x1024xf32>
    %2 = tpu.matmul %1, %0, %cst {dimension_numbers = #tpu.dot_dimension_numbers<[1], [0], [0], [1], [0, 0, 1, 1], [], []>} : vector<32x5xf32>, vector<5x1024xf32>, vector<32x1024xf32> -> vector<32x1024xf32>
    %c0_3 = arith.constant 0 : index
    %c0_4 = arith.constant 0 : index
    %3 = vector.load %arg3[%c0_3, %c0_4] : memref<32x1xf32, #tpu.memory_space<vmem>>, vector<32x1xf32>
    %4 = vector.broadcast %3 : vector<32x1xf32> to vector<32x1024xf32>
    %5 = arith.addf %2, %4 : vector<32x1024xf32>
    %cst_5 = arith.constant 0.000000e+00 : f32
    %6 = vector.broadcast %cst_5 : f32 to vector<32x1024xf32>
    %7 = arith.maximumf %5, %6 : vector<32x1024xf32>
    %c0_6 = arith.constant 0 : index
    %c0_7 = arith.constant 0 : index
    %8 = vector.load %arg4[%c0_6, %c0_7] : memref<8x32xf32, #tpu.memory_space<vmem>>, vector<8x32xf32>
    %cst_8 = arith.constant dense<0.000000e+00> : vector<8x1024xf32>
    %9 = tpu.matmul %8, %7, %cst_8 {dimension_numbers = #tpu.dot_dimension_numbers<[1], [0], [0], [1], [0, 0, 1, 1], [], []>} : vector<8x32xf32>, vector<32x1024xf32>, vector<8x1024xf32> -> vector<8x1024xf32>
    %c0_9 = arith.constant 0 : index
    %c0_10 = arith.constant 0 : index
    %10 = vector.load %arg5[%c0_9, %c0_10] : memref<8x1xf32, #tpu.memory_space<vmem>>, vector<8x1xf32>
    %11 = vector.broadcast %10 : vector<8x1xf32> to vector<8x1024xf32>
    %12 = arith.addf %9, %11 : vector<8x1024xf32>
    %13 = arith.negf %12 : vector<8x1024xf32>
    %14 = math.exp %13 : vector<8x1024xf32>
    %cst_11 = arith.constant 1.000000e+00 : f32
    %15 = vector.broadcast %cst_11 : f32 to vector<8x1024xf32>
    %16 = arith.addf %15, %14 : vector<8x1024xf32>
    %17 = arith.divf %15, %16 : vector<8x1024xf32>
    %c0_12 = arith.constant 0 : index
    %c0_13 = arith.constant 0 : index
    %18 = vector.load %arg6[%c0_12, %c0_13] : memref<8x1xf32, #tpu.memory_space<vmem>>, vector<8x1xf32>
    %19 = vector.broadcast %18 : vector<8x1xf32> to vector<8x1024xf32>
    %20 = arith.mulf %17, %19 : vector<8x1024xf32>
    %c0_14 = arith.constant 0 : index
    %c0_15 = arith.constant 0 : index
    %21 = vector.load %arg7[%c0_14, %c0_15] : memref<8x1xf32, #tpu.memory_space<vmem>>, vector<8x1xf32>
    %22 = vector.broadcast %21 : vector<8x1xf32> to vector<8x1024xf32>
    %23 = arith.addf %20, %22 : vector<8x1024xf32>
    %c0_16 = arith.constant 0 : index
    %c0_17 = arith.constant 0 : index
    %24 = vector.load %arg8[%c0_16, %c0_17] : memref<8x1024xf32, #tpu.memory_space<vmem>>, vector<8x1024xf32>
    tpu.vector_store %arg8[%c0_16, %c0_17], %23 {strides = array<i32>} : memref<8x1024xf32, #tpu.memory_space<vmem>>, vector<8x1024xf32>,
    return
  }
  func.func @transform_0(%arg0: i32) -> (i32, i32) {
    %c0_i32 = arith.constant 0 : i32
    %c0_i32_0 = arith.constant 0 : i32
    return %c0_i32, %arg0 : i32, i32
  }
  func.func @transform_1(%arg0: i32) -> (i32, i32) {
    %c0_i32 = arith.constant 0 : i32
    %c0_i32_0 = arith.constant 0 : i32
    %c0_i32_1 = arith.constant 0 : i32
    return %c0_i32, %c0_i32_0 : i32, i32
  }
  func.func @transform_2(%arg0: i32) -> (i32, i32) {
    %c0_i32 = arith.constant 0 : i32
    %c0_i32_0 = arith.constant 0 : i32
    %c0_i32_1 = arith.constant 0 : i32
    return %c0_i32, %c0_i32_0 : i32, i32
  }
  func.func @transform_3(%arg0: i32) -> (i32, i32) {
    %c0_i32 = arith.constant 0 : i32
    %c0_i32_0 = arith.constant 0 : i32
    %c0_i32_1 = arith.constant 0 : i32
    return %c0_i32, %c0_i32_0 : i32, i32
  }
  func.func @transform_4(%arg0: i32) -> (i32, i32) {
    %c0_i32 = arith.constant 0 : i32
    %c0_i32_0 = arith.constant 0 : i32
    %c0_i32_1 = arith.constant 0 : i32
    return %c0_i32, %c0_i32_0 : i32, i32
  }
  func.func @transform_5(%arg0: i32) -> (i32, i32) {
    %c0_i32 = arith.constant 0 : i32
    %c0_i32_0 = arith.constant 0 : i32
    %c0_i32_1 = arith.constant 0 : i32
    return %c0_i32, %c0_i32_0 : i32, i32
  }
  func.func @transform_6(%arg0: i32) -> (i32, i32) {
    %c0_i32 = arith.constant 0 : i32
    %c0_i32_0 = arith.constant 0 : i32
    %c0_i32_1 = arith.constant 0 : i32
    return %c0_i32, %c0_i32_0 : i32, i32
  }
  func.func @transform_7(%arg0: i32) -> (i32, i32) {
    %c0_i32 = arith.constant 0 : i32
    %c0_i32_0 = arith.constant 0 : i32
    return %c0_i32, %arg0 : i32, i32
  }
}

</mosaic_0001>

<llo_original>
// kernel: tpu_custom_call.1
$region0: #{tpu_custom_call.1}
  #allocation0 [shape = 'u32[]', space=smem, size = 0x4, offset = 0x4, fixed_abs, tag = 'smem constant byte address 0x4 - core index']
  #allocation1 [shape = 'u32[144,128]{1,0:T(1,128)}', space=vmem, size = 0x12000, scoped, tag = 'internal scratch']
  %s0 = inlined_call_operand.vmem [shape: f32[5,1024], index: 0, kind: input, shape index: {}]
  %s1 = inlined_call_operand.vmem [shape: f32[32,5], index: 1, kind: input, shape index: {}]
  %s2 = inlined_call_operand.vmem [shape: f32[32,1], index: 2, kind: input, shape index: {}]
  %s3 = inlined_call_operand.vmem [shape: f32[8,32], index: 3, kind: input, shape index: {}]
  %s4 = inlined_call_operand.vmem [shape: f32[8,1], index: 4, kind: input, shape index: {}]
  %s5 = inlined_call_operand.vmem [shape: f32[8,1], index: 5, kind: input, shape index: {}]
  %s6 = inlined_call_operand.vmem [shape: f32[8,1], index: 6, kind: input, shape index: {}]
  %s7 = inlined_call_operand.hbm [shape: f32[8,1024], index: 7, kind: output, shape index: {}]
  %s8 = sld [smem:[#allocation0]]
  $region38: #{tpu_custom_call.1} parent=0
    _
  %s10 = ssub.s32 1, %s8
  %s11 = scalar_select 0, %s10, %s8
  $region1: #{tpu_custom_call.1} parent=0
    #allocation2 [shape = 'u8[32768]{0}', space=vmem, size = 0x8000, scoped, tag = 'output window, operand 0, single buffered']
    #allocation3 [shape = 's32[1]{0}', space=sflag, size = 0x4, scoped, tag = 'scoped memory for tpu_custom_call.1']
    %12 = vsyncpa [#allocation3], 0
    // Predicated region
    $region2: #{tpu_custom_call.1} parent=1 // pred_check
      _
    $region3: #{tpu_custom_call.1} parent=1 // pred_check_branch
      %14 = sbr.rel (0) target = $region5
    $region4: #{tpu_custom_call.1} parent=1 // pred_region
      _
    $region5: #{tpu_custom_call.1} parent=1 // pred_fallthru
      _
    // Predicated region
    $region6: #{tpu_custom_call.1} parent=1 // pred_check
      _
    $region7: #{tpu_custom_call.1} parent=1 // pred_check_branch
      %16 = sbr.rel (0) target = $region9
    $region8: #{tpu_custom_call.1} parent=1 // pred_region
      _
    $region9: #{tpu_custom_call.1} parent=1 // pred_fallthru
      _
    // Predicated region
    $region10: #{tpu_custom_call.1} parent=1 // pred_check
      _
    $region11: #{tpu_custom_call.1} parent=1 // pred_check_branch
      %18 = sbr.rel (0) target = $region13
    $region12: #{tpu_custom_call.1} parent=1 // pred_region
      _
    $region13: #{tpu_custom_call.1} parent=1 // pred_fallthru
      _
    // Predicated region
    $region14: #{tpu_custom_call.1} parent=1 // pred_check
      _
    $region15: #{tpu_custom_call.1} parent=1 // pred_check_branch
      %20 = sbr.rel (0) target = $region17
    $region16: #{tpu_custom_call.1} parent=1 // pred_region
      _
    $region17: #{tpu_custom_call.1} parent=1 // pred_fallthru
      _
    // Predicated region
    $region18: #{tpu_custom_call.1} parent=1 // pred_check
      _
    $region19: #{tpu_custom_call.1} parent=1 // pred_check_branch
      %22 = sbr.rel (0) target = $region21
    $region20: #{tpu_custom_call.1} parent=1 // pred_region
      _
    $region21: #{tpu_custom_call.1} parent=1 // pred_fallthru
      _
    // Predicated region
    $region22: #{tpu_custom_call.1} parent=1 // pred_check
      _
    $region23: #{tpu_custom_call.1} parent=1 // pred_check_branch
      %24 = sbr.rel (0) target = $region25
    $region24: #{tpu_custom_call.1} parent=1 // pred_region
      _
    $region25: #{tpu_custom_call.1} parent=1 // pred_fallthru
      _
    // Predicated region
    $region26: #{tpu_custom_call.1} parent=1 // pred_check
      _
    $region27: #{tpu_custom_call.1} parent=1 // pred_check_branch
      %26 = sbr.rel (0) target = $region29
    $region28: #{tpu_custom_call.1} parent=1 // pred_region
      _
    $region29: #{tpu_custom_call.1} parent=1 // pred_fallthru
      _
    %v27 = vld [vmem:[%s0] sm:$0x1f]
    %v28 = vld [vmem:[%s0 + $0x8] sm:$0x1f]
    %v29 = vld [vmem:[%s0 + $0x10] sm:$0x1f]
    %v30 = vld [vmem:[%s0 + $0x18] sm:$0x1f]
    %v31 = vld [vmem:[%s0 + $0x20] sm:$0x1f]
    %v32 = vld [vmem:[%s0 + $0x28] sm:$0x1f]
    %v33 = vld [vmem:[%s0 + $0x30] sm:$0x1f]
    %v34 = vld [vmem:[%s0 + $0x38] sm:$0x1f]
    %v35 = vld [vmem:[%s1] sm:$0xff]
    %v36 = vld [vmem:[%s1 + $0x8] sm:$0xff]
    %v37 = vld [vmem:[%s1 + $0x10] sm:$0xff]
    %v38 = vld [vmem:[%s1 + $0x18] sm:$0xff]
    %v39 = vld [vmem:[%s2] sm:$0xff]
    %v40 = vld [vmem:[%s2 + $0x8] sm:$0xff]
    %v41 = vld [vmem:[%s2 + $0x10] sm:$0xff]
    %v42 = vld [vmem:[%s2 + $0x18] sm:$0xff]
    %44 = vset.pattern.permute.xlu0 0
    %45 = vperm.xlu0 %44, %v39
    %v46 = vpop.permute.xlu0 %45
    %49 = vset.pattern.permute.xlu0 0
    %50 = vperm.xlu0 %49, %v40
    %v51 = vpop.permute.xlu0 %50
    %54 = vset.pattern.permute.xlu0 0
    %55 = vperm.xlu0 %54, %v41
    %v56 = vpop.permute.xlu0 %55
    %59 = vset.pattern.permute.xlu0 0
    %60 = vperm.xlu0 %59, %v42
    %v61 = vpop.permute.xlu0 %60
    %vm63 = vcmask 39936
    %v65 = vsel %vm63, %v35, 0
    %v68 = vsel %vm63, %v36, 0
    %v71 = vsel %vm63, %v37, 0
    %v74 = vsel %vm63, %v38, 0
    %vm76 = vcmask 1044480
    %v78 = vsel %vm76, %v27, 0
    %v81 = vsel %vm76, %v28, 0
    %v84 = vsel %vm76, %v29, 0
    %v87 = vsel %vm76, %v30, 0
    %v90 = vsel %vm76, %v31, 0
    %v93 = vsel %vm76, %v32, 0
    %v96 = vsel %vm76, %v33, 0
    %v99 = vsel %vm76, %v34, 0
    %101 = vmatprep.subr.mxu0 %v81
    %102 = vmatpush1.msra.mxu0 %v78
    %103 = vmatprep.subr.mxu0 0.0
    %104 = vmatpush1.msra.mxu0 0.0
    %105 = vmatprep.subr.mxu0 0.0
    %106 = vmatpush1.msra.mxu0 0.0
    %107 = vmatprep.subr.mxu0 0.0
    %108 = vmatpush1.msra.mxu0 0.0
    %109 = vmatprep.subr.mxu0 0.0
    %110 = vmatpush1.msra.mxu0 0.0
    %111 = vmatprep.subr.mxu0 0.0
    %112 = vmatpush1.msra.mxu0 0.0
    %113 = vmatprep.subr.mxu0 0.0
    %114 = vmatpush1.msra.mxu0 0.0
    %115 = vmatprep.subr.mxu0 0.0
    %116 = vmatpush1.msra.mxu0 0.0
    %117 = vmatprep.subr.mxu0 0.0
    %118 = vmatpush1.msra.mxu0 0.0
    %119 = vmatprep.subr.mxu0 0.0
    %120 = vmatpush1.msra.mxu0 0.0
    %121 = vmatprep.subr.mxu0 0.0
    %122 = vmatpush1.msra.mxu0 0.0
    %123 = vmatprep.subr.mxu0 0.0
    %124 = vmatpush1.msra.mxu0 0.0
    %125 = vmatprep.subr.mxu0 0.0
    %126 = vmatpush1.msra.mxu0 0.0
    %127 = vmatprep.subr.mxu0 0.0
    %128 = vmatpush1.msra.mxu0 0.0
    %129 = vmatprep.subr.mxu0 0.0
    %130 = vmatpush1.msra.mxu0 0.0
    %131 = vmatprep.subr.mxu0 0.0
    %132 = vmatpush1.msra.mxu0 0.0
    %133 = vmatprep.subr.mxu0 0.0
    %134 = vmatpush1.msra.mxu0 0.0
    %135 = vmatprep.subr.mxu0 0.0
    %136 = vmatpush1.msra.mxu0 0.0
    %137 = vmatprep.subr.mxu0 0.0
    %138 = vmatpush1.msra.mxu0 0.0
    %139 = vmatprep.subr.mxu0 0.0
    %140 = vmatpush1.msra.mxu0 0.0
    %141 = vmatprep.subr.mxu0 0.0
    %142 = vmatpush1.msra.mxu0 0.0
    %143 = vmatprep.subr.mxu0 0.0
    %144 = vmatpush1.msra.mxu0 0.0
    %145 = vmatprep.subr.mxu0 0.0
    %146 = vmatpush1.msra.mxu0 0.0
    %147 = vmatprep.subr.mxu0 0.0
    %148 = vmatpush1.msra.mxu0 0.0
    %149 = vmatprep.subr.mxu0 0.0
    %150 = vmatpush1.msra.mxu0 0.0
    %151 = vmatprep.subr.mxu0 0.0
    %152 = vmatpush1.msra.mxu0 0.0
    %153 = vmatprep.subr.mxu0 0.0
    %154 = vmatpush1.msra.mxu0 0.0
    %155 = vmatprep.subr.mxu0 0.0
    %156 = vmatpush1.msra.mxu0 0.0
    %157 = vmatprep.subr.mxu0 0.0
    %158 = vmatpush1.msra.mxu0 0.0
    %159 = vmatprep.subr.mxu0 0.0
    %160 = vmatpush1.msra.mxu0 0.0
    %161 = vmatprep.subr.mxu0 0.0
    %162 = vmatpush1.msra.mxu0 0.0
    %163 = vmatprep.subr.mxu0 0.0
    %164 = vmatpush1.msra.mxu0 0.0
    %165 = vmatprep.mubr.f32.mxu0 0.0
    %166 = vmatmul.mubr.f32.gmra.mrb[0].mxu0 %v65
    %v167 = vpop.f32.mrb[0].mxu0
    %v168 = vadd.f32 %v46, %v167
    %v169 = vpop.f32.mrb[0].mxu0
    %v170 = vadd.f32 %v46, %v169
    %171 = vmatprep.mubr.f32.mxu0 0.0
    %172 = vmatmul.mubr.f32.gmra.mrb[0].mxu0 %v68
    %v173 = vpop.f32.mrb[0].mxu0
    %v174 = vadd.f32 %v51, %v173
    %v175 = vpop.f32.mrb[0].mxu0
    %v176 = vadd.f32 %v51, %v175
    %177 = vmatprep.mubr.f32.mxu0 0.0
    %178 = vmatmul.mubr.f32.gmra.mrb[0].mxu0 %v71
    %v179 = vpop.f32.mrb[0].mxu0
    %v180 = vadd.f32 %v56, %v179
    %v181 = vpop.f32.mrb[0].mxu0
    %v182 = vadd.f32 %v56, %v181
    %183 = vmatprep.mubr.f32.mxu0 0.0
    %184 = vmatmul.mubr.f32.gmra.mrb[0].mxu0 %v74
    %v185 = vpop.f32.mrb[0].mxu0
    %v186 = vadd.f32 %v61, %v185
    %v187 = vpop.f32.mrb[0].mxu0
    %v188 = vadd.f32 %v61, %v187
    %189 = vdwg.mxu0
    %190 = vmatprep.subr.mxu0 %v87
    %191 = vmatpush1.msra.mxu0 %v84
    %192 = vmatprep.subr.mxu0 0.0
    %193 = vmatpush1.msra.mxu0 0.0
    %194 = vmatprep.subr.mxu0 0.0
    %195 = vmatpush1.msra.mxu0 0.0
    %196 = vmatprep.subr.mxu0 0.0
    %197 = vmatpush1.msra.mxu0 0.0
    %198 = vmatprep.subr.mxu0 0.0
    %199 = vmatpush1.msra.mxu0 0.0
    %200 = vmatprep.subr.mxu0 0.0
    %201 = vmatpush1.msra.mxu0 0.0
    %202 = vmatprep.subr.mxu0 0.0
    %203 = vmatpush1.msra.mxu0 0.0
    %204 = vmatprep.subr.mxu0 0.0
    %205 = vmatpush1.msra.mxu0 0.0
    %206 = vmatprep.subr.mxu0 0.0
    %207 = vmatpush1.msra.mxu0 0.0
    %208 = vmatprep.subr.mxu0 0.0
    %209 = vmatpush1.msra.mxu0 0.0
    %210 = vmatprep.subr.mxu0 0.0
    %211 = vmatpush1.msra.mxu0 0.0
    %212 = vmatprep.subr.mxu0 0.0
    %213 = vmatpush1.msra.mxu0 0.0
    %214 = vmatprep.subr.mxu0 0.0
    %215 = vmatpush1.msra.mxu0 0.0
    %216 = vmatprep.subr.mxu0 0.0
    %217 = vmatpush1.msra.mxu0 0.0
    %218 = vmatprep.subr.mxu0 0.0
    %219 = vmatpush1.msra.mxu0 0.0
    %220 = vmatprep.subr.mxu0 0.0
    %221 = vmatpush1.msra.mxu0 0.0
    %222 = vmatprep.subr.mxu0 0.0
    %223 = vmatpush1.msra.mxu0 0.0
    %224 = vmatprep.subr.mxu0 0.0
    %225 = vmatpush1.msra.mxu0 0.0
    %226 = vmatprep.subr.mxu0 0.0
    %227 = vmatpush1.msra.mxu0 0.0
    %228 = vmatprep.subr.mxu0 0.0
    %229 = vmatpush1.msra.mxu0 0.0
    %230 = vmatprep.subr.mxu0 0.0
    %231 = vmatpush1.msra.mxu0 0.0
    %232 = vmatprep.subr.mxu0 0.0
    %233 = vmatpush1.msra.mxu0 0.0
    %234 = vmatprep.subr.mxu0 0.0
    %235 = vmatpush1.msra.mxu0 0.0
    %236 = vmatprep.subr.mxu0 0.0
    %237 = vmatpush1.msra.mxu0 0.0
    %238 = vmatprep.subr.mxu0 0.0
    %239 = vmatpush1.msra.mxu0 0.0
    %240 = vmatprep.subr.mxu0 0.0
    %241 = vmatpush1.msra.mxu0 0.0
    %242 = vmatprep.subr.mxu0 0.0
    %243 = vmatpush1.msra.mxu0 0.0
    %244 = vmatprep.subr.mxu0 0.0
    %245 = vmatpush1.msra.mxu0 0.0
    %246 = vmatprep.subr.mxu0 0.0
    %247 = vmatpush1.msra.mxu0 0.0
    %248 = vmatprep.subr.mxu0 0.0
    %249 = vmatpush1.msra.mxu0 0.0
    %250 = vmatprep.subr.mxu0 0.0
    %251 = vmatpush1.msra.mxu0 0.0
    %252 = vmatprep.subr.mxu0 0.0
    %253 = vmatpush1.msra.mxu0 0.0
    %254 = vmatprep.mubr.f32.mxu0 0.0
    %255 = vmatmul.mubr.f32.gmra.mrb[0].mxu0 %v65
    %v256 = vpop.f32.mrb[0].mxu0
    %v257 = vadd.f32 %v46, %v256
    %v258 = vpop.f32.mrb[0].mxu0
    %v259 = vadd.f32 %v46, %v258
    %260 = vmatprep.mubr.f32.mxu0 0.0
    %261 = vmatmul.mubr.f32.gmra.mrb[0].mxu0 %v68
    %v262 = vpop.f32.mrb[0].mxu0
    %v263 = vadd.f32 %v51, %v262
    %v264 = vpop.f32.mrb[0].mxu0
    %v265 = vadd.f32 %v51, %v264
    %266 = vmatprep.mubr.f32.mxu0 0.0
    %267 = vmatmul.mubr.f32.gmra.mrb[0].mxu0 %v71
    %v268 = vpop.f32.mrb[0].mxu0
    %v269 = vadd.f32 %v56, %v268
    %v270 = vpop.f32.mrb[0].mxu0
    %v271 = vadd.f32 %v56, %v270
    %272 = vmatprep.mubr.f32.mxu0 0.0
    %273 = vmatmul.mubr.f32.gmra.mrb[0].mxu0 %v74
    %v274 = vpop.f32.mrb[0].mxu0
    %v275 = vadd.f32 %v61, %v274
    %v276 = vpop.f32.mrb[0].mxu0
    %v277 = vadd.f32 %v61, %v276
    %278 = vdwg.mxu0
    %279 = vmatprep.subr.mxu0 %v93
    %280 = vmatpush1.msra.mxu0 %v90
    %281 = vmatprep.subr.mxu0 0.0
    %282 = vmatpush1.msra.mxu0 0.0
    %283 = vmatprep.subr.mxu0 0.0
    %284 = vmatpush1.msra.mxu0 0.0
    %285 = vmatprep.subr.mxu0 0.0
    %286 = vmatpush1.msra.mxu0 0.0
    %287 = vmatprep.subr.mxu0 0.0
    %288 = vmatpush1.msra.mxu0 0.0
    %289 = vmatprep.subr.mxu0 0.0
    %290 = vmatpush1.msra.mxu0 0.0
    %291 = vmatprep.subr.mxu0 0.0
    %292 = vmatpush1.msra.mxu0 0.0
    %293 = vmatprep.subr.mxu0 0.0
    %294 = vmatpush1.msra.mxu0 0.0
    %295 = vmatprep.subr.mxu0 0.0
    %296 = vmatpush1.msra.mxu0 0.0
    %297 = vmatprep.subr.mxu0 0.0
    %298 = vmatpush1.msra.mxu0 0.0
    %299 = vmatprep.subr.mxu0 0.0
    %300 = vmatpush1.msra.mxu0 0.0
    %301 = vmatprep.subr.mxu0 0.0
    %302 = vmatpush1.msra.mxu0 0.0
    %303 = vmatprep.subr.mxu0 0.0
    %304 = vmatpush1.msra.mxu0 0.0
    %305 = vmatprep.subr.mxu0 0.0
    %306 = vmatpush1.msra.mxu0 0.0
    %307 = vmatprep.subr.mxu0 0.0
    %308 = vmatpush1.msra.mxu0 0.0
    %309 = vmatprep.subr.mxu0 0.0
    %310 = vmatpush1.msra.mxu0 0.0
    %311 = vmatprep.subr.mxu0 0.0
    %312 = vmatpush1.msra.mxu0 0.0
    %313 = vmatprep.subr.mxu0 0.0
    %314 = vmatpush1.msra.mxu0 0.0
    %315 = vmatprep.subr.mxu0 0.0
    %316 = vmatpush1.msra.mxu0 0.0
    %317 = vmatprep.subr.mxu0 0.0
    %318 = vmatpush1.msra.mxu0 0.0
    %319 = vmatprep.subr.mxu0 0.0
    %320 = vmatpush1.msra.mxu0 0.0
    %321 = vmatprep.subr.mxu0 0.0
    %322 = vmatpush1.msra.mxu0 0.0
    %323 = vmatprep.subr.mxu0 0.0
    %324 = vmatpush1.msra.mxu0 0.0
    %325 = vmatprep.subr.mxu0 0.0
    %326 = vmatpush1.msra.mxu0 0.0
    %327 = vmatprep.subr.mxu0 0.0
    %328 = vmatpush1.msra.mxu0 0.0
    %329 = vmatprep.subr.mxu0 0.0
    %330 = vmatpush1.msra.mxu0 0.0
    %331 = vmatprep.subr.mxu0 0.0
    %332 = vmatpush1.msra.mxu0 0.0
    %333 = vmatprep.subr.mxu0 0.0
    %334 = vmatpush1.msra.mxu0 0.0
    %335 = vmatprep.subr.mxu0 0.0
    %336 = vmatpush1.msra.mxu0 0.0
    %337 = vmatprep.subr.mxu0 0.0
    %338 = vmatpush1.msra.mxu0 0.0
    %339 = vmatprep.subr.mxu0 0.0
    %340 = vmatpush1.msra.mxu0 0.0
    %341 = vmatprep.subr.mxu0 0.0
    %342 = vmatpush1.msra.mxu0 0.0
    %343 = vmatprep.mubr.f32.mxu0 0.0
    %344 = vmatmul.mubr.f32.gmra.mrb[0].mxu0 %v65
    %v345 = vpop.f32.mrb[0].mxu0
    %v346 = vadd.f32 %v46, %v345
    %v347 = vpop.f32.mrb[0].mxu0
    %v348 = vadd.f32 %v46, %v347
    %349 = vmatprep.mubr.f32.mxu0 0.0
    %350 = vmatmul.mubr.f32.gmra.mrb[0].mxu0 %v68
    %v351 = vpop.f32.mrb[0].mxu0
    %v352 = vadd.f32 %v51, %v351
    %v353 = vpop.f32.mrb[0].mxu0
    %v354 = vadd.f32 %v51, %v353
    %355 = vmatprep.mubr.f32.mxu0 0.0
    %356 = vmatmul.mubr.f32.gmra.mrb[0].mxu0 %v71
    %v357 = vpop.f32.mrb[0].mxu0
    %v358 = vadd.f32 %v56, %v357
    %v359 = vpop.f32.mrb[0].mxu0
    %v360 = vadd.f32 %v56, %v359
    %361 = vmatprep.mubr.f32.mxu0 0.0
    %362 = vmatmul.mubr.f32.gmra.mrb[0].mxu0 %v74
    %v363 = vpop.f32.mrb[0].mxu0
    %v364 = vadd.f32 %v61, %v363
    %v365 = vpop.f32.mrb[0].mxu0
    %v366 = vadd.f32 %v61, %v365
    %367 = vdwg.mxu0
    %368 = vmatprep.subr.mxu0 %v99
    %369 = vmatpush1.msra.mxu0 %v96
    %370 = vmatprep.subr.mxu0 0.0
    %371 = vmatpush1.msra.mxu0 0.0
    %372 = vmatprep.subr.mxu0 0.0
    %373 = vmatpush1.msra.mxu0 0.0
    %374 = vmatprep.subr.mxu0 0.0
    %375 = vmatpush1.msra.mxu0 0.0
    %376 = vmatprep.subr.mxu0 0.0
    %377 = vmatpush1.msra.mxu0 0.0
    %378 = vmatprep.subr.mxu0 0.0
    %379 = vmatpush1.msra.mxu0 0.0
    %380 = vmatprep.subr.mxu0 0.0
    %381 = vmatpush1.msra.mxu0 0.0
    %382 = vmatprep.subr.mxu0 0.0
    %383 = vmatpush1.msra.mxu0 0.0
    %384 = vmatprep.subr.mxu0 0.0
    %385 = vmatpush1.msra.mxu0 0.0
    %386 = vmatprep.subr.mxu0 0.0
    %387 = vmatpush1.msra.mxu0 0.0
    %388 = vmatprep.subr.mxu0 0.0
    %389 = vmatpush1.msra.mxu0 0.0
    %390 = vmatprep.subr.mxu0 0.0
    %391 = vmatpush1.msra.mxu0 0.0
    %392 = vmatprep.subr.mxu0 0.0
    %393 = vmatpush1.msra.mxu0 0.0
    %394 = vmatprep.subr.mxu0 0.0
    %395 = vmatpush1.msra.mxu0 0.0
    %396 = vmatprep.subr.mxu0 0.0
    %397 = vmatpush1.msra.mxu0 0.0
    %398 = vmatprep.subr.mxu0 0.0
    %399 = vmatpush1.msra.mxu0 0.0
    %400 = vmatprep.subr.mxu0 0.0
    %401 = vmatpush1.msra.mxu0 0.0
    %402 = vmatprep.subr.mxu0 0.0
    %403 = vmatpush1.msra.mxu0 0.0
    %404 = vmatprep.subr.mxu0 0.0
    %405 = vmatpush1.msra.mxu0 0.0
    %406 = vmatprep.subr.mxu0 0.0
    %407 = vmatpush1.msra.mxu0 0.0
    %408 = vmatprep.subr.mxu0 0.0
    %409 = vmatpush1.msra.mxu0 0.0
    %410 = vmatprep.subr.mxu0 0.0
    %411 = vmatpush1.msra.mxu0 0.0
    %412 = vmatprep.subr.mxu0 0.0
    %413 = vmatpush1.msra.mxu0 0.0
    %414 = vmatprep.subr.mxu0 0.0
    %415 = vmatpush1.msra.mxu0 0.0
    %416 = vmatprep.subr.mxu0 0.0
    %417 = vmatpush1.msra.mxu0 0.0
    %418 = vmatprep.subr.mxu0 0.0
    %419 = vmatpush1.msra.mxu0 0.0
    %420 = vmatprep.subr.mxu0 0.0
    %421 = vmatpush1.msra.mxu0 0.0
    %422 = vmatprep.subr.mxu0 0.0
    %423 = vmatpush1.msra.mxu0 0.0
    %424 = vmatprep.subr.mxu0 0.0
    %425 = vmatpush1.msra.mxu0 0.0
    %426 = vmatprep.subr.mxu0 0.0
    %427 = vmatpush1.msra.mxu0 0.0
    %428 = vmatprep.subr.mxu0 0.0
    %429 = vmatpush1.msra.mxu0 0.0
    %430 = vmatprep.subr.mxu0 0.0
    %431 = vmatpush1.msra.mxu0 0.0
    %432 = vmatprep.mubr.f32.mxu0 0.0
    %433 = vmatmul.mubr.f32.gmra.mrb[0].mxu0 %v65
    %v434 = vpop.f32.mrb[0].mxu0
    %v435 = vadd.f32 %v46, %v434
    %v436 = vpop.f32.mrb[0].mxu0
    %v437 = vadd.f32 %v46, %v436
    %438 = vmatprep.mubr.f32.mxu0 0.0
    %439 = vmatmul.mubr.f32.gmra.mrb[0].mxu0 %v68
    %v440 = vpop.f32.mrb[0].mxu0
    %v441 = vadd.f32 %v51, %v440
    %v442 = vpop.f32.mrb[0].mxu0
    %v443 = vadd.f32 %v51, %v442
    %444 = vmatprep.mubr.f32.mxu0 0.0
    %445 = vmatmul.mubr.f32.gmra.mrb[0].mxu0 %v71
    %v446 = vpop.f32.mrb[0].mxu0
    %v447 = vadd.f32 %v56, %v446
    %v448 = vpop.f32.mrb[0].mxu0
    %v449 = vadd.f32 %v56, %v448
    %450 = vmatprep.mubr.f32.mxu0 0.0
    %451 = vmatmul.mubr.f32.gmra.mrb[0].mxu0 %v74
    %v452 = vpop.f32.mrb[0].mxu0
    %v453 = vadd.f32 %v61, %v452
    %v454 = vpop.f32.mrb[0].mxu0
    %v455 = vadd.f32 %v61, %v454
    %456 = vdwg.mxu0
    %v457 = vmax.f32 %v168, 0.0
    %v458 = vmax.f32 %v170, 0.0
    %v459 = vmax.f32 %v257, 0.0
    %v460 = vmax.f32 %v259, 0.0
    %v461 = vmax.f32 %v346, 0.0
    %v462 = vmax.f32 %v348, 0.0
    %v463 = vmax.f32 %v435, 0.0
    %v464 = vmax.f32 %v437, 0.0
    %v465 = vmax.f32 %v174, 0.0
    %v466 = vmax.f32 %v176, 0.0
    %v467 = vmax.f32 %v263, 0.0
    %v468 = vmax.f32 %v265, 0.0
    %v469 = vmax.f32 %v352, 0.0
    %v470 = vmax.f32 %v354, 0.0
    %v471 = vmax.f32 %v441, 0.0
    %v472 = vmax.f32 %v443, 0.0
    %v473 = vmax.f32 %v180, 0.0
    %v474 = vmax.f32 %v182, 0.0
    %v475 = vmax.f32 %v269, 0.0
    %v476 = vmax.f32 %v271, 0.0
    %v477 = vmax.f32 %v358, 0.0
    %v478 = vmax.f32 %v360, 0.0
    %v479 = vmax.f32 %v447, 0.0
    %v480 = vmax.f32 %v449, 0.0
    %v481 = vmax.f32 %v186, 0.0
    %v482 = vmax.f32 %v188, 0.0
    %v483 = vmax.f32 %v275, 0.0
    %v484 = vmax.f32 %v277, 0.0
    %v485 = vmax.f32 %v364, 0.0
    %v486 = vmax.f32 %v366, 0.0
    %v487 = vmax.f32 %v453, 0.0
    %v488 = vmax.f32 %v455, 0.0
    %v489 = vld [vmem:[%s3] sm:$0xff]
    %v490 = vld [vmem:[%s4] sm:$0xff]
    %492 = vset.pattern.permute.xlu0 0
    %493 = vperm.xlu0 %492, %v490
    %v494 = vpop.permute.xlu0 %493
    %vm496 = vcmask 261120
    %v498 = vsel %vm496, %v489, 0
    %500 = vmatprep.subr.mxu0 %v458
    %501 = vmatpush1.msra.mxu0 %v457
    %502 = vmatprep.subr.mxu0 %v466
    %503 = vmatpush1.msra.mxu0 %v465
    %504 = vmatprep.subr.mxu0 %v474
    %505 = vmatpush1.msra.mxu0 %v473
    %506 = vmatprep.subr.mxu0 %v482
    %507 = vmatpush1.msra.mxu0 %v481
    %508 = vmatprep.subr.mxu0 0.0
    %509 = vmatpush1.msra.mxu0 0.0
    %510 = vmatprep.subr.mxu0 0.0
    %511 = vmatpush1.msra.mxu0 0.0
    %512 = vmatprep.subr.mxu0 0.0
    %513 = vmatpush1.msra.mxu0 0.0
    %514 = vmatprep.subr.mxu0 0.0
    %515 = vmatpush1.msra.mxu0 0.0
    %516 = vmatprep.subr.mxu0 0.0
    %517 = vmatpush1.msra.mxu0 0.0
    %518 = vmatprep.subr.mxu0 0.0
    %519 = vmatpush1.msra.mxu0 0.0
    %520 = vmatprep.subr.mxu0 0.0
    %521 = vmatpush1.msra.mxu0 0.0
    %522 = vmatprep.subr.mxu0 0.0
    %523 = vmatpush1.msra.mxu0 0.0
    %524 = vmatprep.subr.mxu0 0.0
    %525 = vmatpush1.msra.mxu0 0.0
    %526 = vmatprep.subr.mxu0 0.0
    %527 = vmatpush1.msra.mxu0 0.0
    %528 = vmatprep.subr.mxu0 0.0
    %529 = vmatpush1.msra.mxu0 0.0
    %530 = vmatprep.subr.mxu0 0.0
    %531 = vmatpush1.msra.mxu0 0.0
    %532 = vmatprep.subr.mxu0 0.0
    %533 = vmatpush1.msra.mxu0 0.0
    %534 = vmatprep.subr.mxu0 0.0
    %535 = vmatpush1.msra.mxu0 0.0
    %536 = vmatprep.subr.mxu0 0.0
    %537 = vmatpush1.msra.mxu0 0.0
    %538 = vmatprep.subr.mxu0 0.0
    %539 = vmatpush1.msra.mxu0 0.0
    %540 = vmatprep.subr.mxu0 0.0
    %541 = vmatpush1.msra.mxu0 0.0
    %542 = vmatprep.subr.mxu0 0.0
    %543 = vmatpush1.msra.mxu0 0.0
    %544 = vmatprep.subr.mxu0 0.0
    %545 = vmatpush1.msra.mxu0 0.0
    %546 = vmatprep.subr.mxu0 0.0
    %547 = vmatpush1.msra.mxu0 0.0
    %548 = vmatprep.subr.mxu0 0.0
    %549 = vmatpush1.msra.mxu0 0.0
    %550 = vmatprep.subr.mxu0 0.0
    %551 = vmatpush1.msra.mxu0 0.0
    %552 = vmatprep.subr.mxu0 0.0
    %553 = vmatpush1.msra.mxu0 0.0
    %554 = vmatprep.subr.mxu0 0.0
    %555 = vmatpush1.msra.mxu0 0.0
    %556 = vmatprep.subr.mxu0 0.0
    %557 = vmatpush1.msra.mxu0 0.0
    %558 = vmatprep.subr.mxu0 0.0
    %559 = vmatpush1.msra.mxu0 0.0
    %560 = vmatprep.subr.mxu0 0.0
    %561 = vmatpush1.msra.mxu0 0.0
    %562 = vmatprep.subr.mxu0 0.0
    %563 = vmatpush1.msra.mxu0 0.0
    %564 = vmatprep.mubr.f32.mxu0 0.0
    %565 = vmatmul.mubr.f32.gmra.mrb[0].mxu0 %v498
    %v566 = vpop.f32.mrb[0].mxu0
    %v567 = vadd.f32 %v494, %v566
    %v568 = vpop.f32.mrb[0].mxu0
    %v569 = vadd.f32 %v494, %v568
    %570 = vdwg.mxu0
    %571 = vmatprep.subr.mxu0 %v460
    %572 = vmatpush1.msra.mxu0 %v459
    %573 = vmatprep.subr.mxu0 %v468
    %574 = vmatpush1.msra.mxu0 %v467
    %575 = vmatprep.subr.mxu0 %v476
    %576 = vmatpush1.msra.mxu0 %v475
    %577 = vmatprep.subr.mxu0 %v484
    %578 = vmatpush1.msra.mxu0 %v483
    %579 = vmatprep.subr.mxu0 0.0
    %580 = vmatpush1.msra.mxu0 0.0
    %581 = vmatprep.subr.mxu0 0.0
    %582 = vmatpush1.msra.mxu0 0.0
    %583 = vmatprep.subr.mxu0 0.0
    %584 = vmatpush1.msra.mxu0 0.0
    %585 = vmatprep.subr.mxu0 0.0
    %586 = vmatpush1.msra.mxu0 0.0
    %587 = vmatprep.subr.mxu0 0.0
    %588 = vmatpush1.msra.mxu0 0.0
    %589 = vmatprep.subr.mxu0 0.0
    %590 = vmatpush1.msra.mxu0 0.0
    %591 = vmatprep.subr.mxu0 0.0
    %592 = vmatpush1.msra.mxu0 0.0
    %593 = vmatprep.subr.mxu0 0.0
    %594 = vmatpush1.msra.mxu0 0.0
    %595 = vmatprep.subr.mxu0 0.0
    %596 = vmatpush1.msra.mxu0 0.0
    %597 = vmatprep.subr.mxu0 0.0
    %598 = vmatpush1.msra.mxu0 0.0
    %599 = vmatprep.subr.mxu0 0.0
    %600 = vmatpush1.msra.mxu0 0.0
    %601 = vmatprep.subr.mxu0 0.0
    %602 = vmatpush1.msra.mxu0 0.0
    %603 = vmatprep.subr.mxu0 0.0
    %604 = vmatpush1.msra.mxu0 0.0
    %605 = vmatprep.subr.mxu0 0.0
    %606 = vmatpush1.msra.mxu0 0.0
    %607 = vmatprep.subr.mxu0 0.0
    %608 = vmatpush1.msra.mxu0 0.0
    %609 = vmatprep.subr.mxu0 0.0
    %610 = vmatpush1.msra.mxu0 0.0
    %611 = vmatprep.subr.mxu0 0.0
    %612 = vmatpush1.msra.mxu0 0.0
    %613 = vmatprep.subr.mxu0 0.0
    %614 = vmatpush1.msra.mxu0 0.0
    %615 = vmatprep.subr.mxu0 0.0
    %616 = vmatpush1.msra.mxu0 0.0
    %617 = vmatprep.subr.mxu0 0.0
    %618 = vmatpush1.msra.mxu0 0.0
    %619 = vmatprep.subr.mxu0 0.0
    %620 = vmatpush1.msra.mxu0 0.0
    %621 = vmatprep.subr.mxu0 0.0
    %622 = vmatpush1.msra.mxu0 0.0
    %623 = vmatprep.subr.mxu0 0.0
    %624 = vmatpush1.msra.mxu0 0.0
    %625 = vmatprep.subr.mxu0 0.0
    %626 = vmatpush1.msra.mxu0 0.0
    %627 = vmatprep.subr.mxu0 0.0
    %628 = vmatpush1.msra.mxu0 0.0
    %629 = vmatprep.subr.mxu0 0.0
    %630 = vmatpush1.msra.mxu0 0.0
    %631 = vmatprep.subr.mxu0 0.0
    %632 = vmatpush1.msra.mxu0 0.0
    %633 = vmatprep.subr.mxu0 0.0
    %634 = vmatpush1.msra.mxu0 0.0
    %635 = vmatprep.mubr.f32.mxu0 0.0
    %636 = vmatmul.mubr.f32.gmra.mrb[0].mxu0 %v498
    %v637 = vpop.f32.mrb[0].mxu0
    %v638 = vadd.f32 %v494, %v637
    %v639 = vpop.f32.mrb[0].mxu0
    %v640 = vadd.f32 %v494, %v639
    %641 = vdwg.mxu0
    %642 = vmatprep.subr.mxu0 %v462
    %643 = vmatpush1.msra.mxu0 %v461
    %644 = vmatprep.subr.mxu0 %v470
    %645 = vmatpush1.msra.mxu0 %v469
    %646 = vmatprep.subr.mxu0 %v478
    %647 = vmatpush1.msra.mxu0 %v477
    %648 = vmatprep.subr.mxu0 %v486
    %649 = vmatpush1.msra.mxu0 %v485
    %650 = vmatprep.subr.mxu0 0.0
    %651 = vmatpush1.msra.mxu0 0.0
    %652 = vmatprep.subr.mxu0 0.0
    %653 = vmatpush1.msra.mxu0 0.0
    %654 = vmatprep.subr.mxu0 0.0
    %655 = vmatpush1.msra.mxu0 0.0
    %656 = vmatprep.subr.mxu0 0.0
    %657 = vmatpush1.msra.mxu0 0.0
    %658 = vmatprep.subr.mxu0 0.0
    %659 = vmatpush1.msra.mxu0 0.0
    %660 = vmatprep.subr.mxu0 0.0
    %661 = vmatpush1.msra.mxu0 0.0
    %662 = vmatprep.subr.mxu0 0.0
    %663 = vmatpush1.msra.mxu0 0.0
    %664 = vmatprep.subr.mxu0 0.0
    %665 = vmatpush1.msra.mxu0 0.0
    %666 = vmatprep.subr.mxu0 0.0
    %667 = vmatpush1.msra.mxu0 0.0
    %668 = vmatprep.subr.mxu0 0.0
    %669 = vmatpush1.msra.mxu0 0.0
    %670 = vmatprep.subr.mxu0 0.0
    %671 = vmatpush1.msra.mxu0 0.0
    %672 = vmatprep.subr.mxu0 0.0
    %673 = vmatpush1.msra.mxu0 0.0
    %674 = vmatprep.subr.mxu0 0.0
    %675 = vmatpush1.msra.mxu0 0.0
    %676 = vmatprep.subr.mxu0 0.0
    %677 = vmatpush1.msra.mxu0 0.0
    %678 = vmatprep.subr.mxu0 0.0
    %679 = vmatpush1.msra.mxu0 0.0
    %680 = vmatprep.subr.mxu0 0.0
    %681 = vmatpush1.msra.mxu0 0.0
    %682 = vmatprep.subr.mxu0 0.0
    %683 = vmatpush1.msra.mxu0 0.0
    %684 = vmatprep.subr.mxu0 0.0
    %685 = vmatpush1.msra.mxu0 0.0
    %686 = vmatprep.subr.mxu0 0.0
    %687 = vmatpush1.msra.mxu0 0.0
    %688 = vmatprep.subr.mxu0 0.0
    %689 = vmatpush1.msra.mxu0 0.0
    %690 = vmatprep.subr.mxu0 0.0
    %691 = vmatpush1.msra.mxu0 0.0
    %692 = vmatprep.subr.mxu0 0.0
    %693 = vmatpush1.msra.mxu0 0.0
    %694 = vmatprep.subr.mxu0 0.0
    %695 = vmatpush1.msra.mxu0 0.0
    %696 = vmatprep.subr.mxu0 0.0
    %697 = vmatpush1.msra.mxu0 0.0
    %698 = vmatprep.subr.mxu0 0.0
    %699 = vmatpush1.msra.mxu0 0.0
    %700 = vmatprep.subr.mxu0 0.0
    %701 = vmatpush1.msra.mxu0 0.0
    %702 = vmatprep.subr.mxu0 0.0
    %703 = vmatpush1.msra.mxu0 0.0
    %704 = vmatprep.subr.mxu0 0.0
    %705 = vmatpush1.msra.mxu0 0.0
    %706 = vmatprep.mubr.f32.mxu0 0.0
    %707 = vmatmul.mubr.f32.gmra.mrb[0].mxu0 %v498
    %v708 = vpop.f32.mrb[0].mxu0
    %v709 = vadd.f32 %v494, %v708
    %v710 = vpop.f32.mrb[0].mxu0
    %v711 = vadd.f32 %v494, %v710
    %712 = vdwg.mxu0
    %713 = vmatprep.subr.mxu0 %v464
    %714 = vmatpush1.msra.mxu0 %v463
    %715 = vmatprep.subr.mxu0 %v472
    %716 = vmatpush1.msra.mxu0 %v471
    %717 = vmatprep.subr.mxu0 %v480
    %718 = vmatpush1.msra.mxu0 %v479
    %719 = vmatprep.subr.mxu0 %v488
    %720 = vmatpush1.msra.mxu0 %v487
    %721 = vmatprep.subr.mxu0 0.0
    %722 = vmatpush1.msra.mxu0 0.0
    %723 = vmatprep.subr.mxu0 0.0
    %724 = vmatpush1.msra.mxu0 0.0
    %725 = vmatprep.subr.mxu0 0.0
    %726 = vmatpush1.msra.mxu0 0.0
    %727 = vmatprep.subr.mxu0 0.0
    %728 = vmatpush1.msra.mxu0 0.0
    %729 = vmatprep.subr.mxu0 0.0
    %730 = vmatpush1.msra.mxu0 0.0
    %731 = vmatprep.subr.mxu0 0.0
    %732 = vmatpush1.msra.mxu0 0.0
    %733 = vmatprep.subr.mxu0 0.0
    %734 = vmatpush1.msra.mxu0 0.0
    %735 = vmatprep.subr.mxu0 0.0
    %736 = vmatpush1.msra.mxu0 0.0
    %737 = vmatprep.subr.mxu0 0.0
    %738 = vmatpush1.msra.mxu0 0.0
    %739 = vmatprep.subr.mxu0 0.0
    %740 = vmatpush1.msra.mxu0 0.0
    %741 = vmatprep.subr.mxu0 0.0
    %742 = vmatpush1.msra.mxu0 0.0
    %743 = vmatprep.subr.mxu0 0.0
    %744 = vmatpush1.msra.mxu0 0.0
    %745 = vmatprep.subr.mxu0 0.0
    %746 = vmatpush1.msra.mxu0 0.0
    %747 = vmatprep.subr.mxu0 0.0
    %748 = vmatpush1.msra.mxu0 0.0
    %749 = vmatprep.subr.mxu0 0.0
    %750 = vmatpush1.msra.mxu0 0.0
    %751 = vmatprep.subr.mxu0 0.0
    %752 = vmatpush1.msra.mxu0 0.0
    %753 = vmatprep.subr.mxu0 0.0
    %754 = vmatpush1.msra.mxu0 0.0
    %755 = vmatprep.subr.mxu0 0.0
    %756 = vmatpush1.msra.mxu0 0.0
    %757 = vmatprep.subr.mxu0 0.0
    %758 = vmatpush1.msra.mxu0 0.0
    %759 = vmatprep.subr.mxu0 0.0
    %760 = vmatpush1.msra.mxu0 0.0
    %761 = vmatprep.subr.mxu0 0.0
    %762 = vmatpush1.msra.mxu0 0.0
    %763 = vmatprep.subr.mxu0 0.0
    %764 = vmatpush1.msra.mxu0 0.0
    %765 = vmatprep.subr.mxu0 0.0
    %766 = vmatpush1.msra.mxu0 0.0
    %767 = vmatprep.subr.mxu0 0.0
    %768 = vmatpush1.msra.mxu0 0.0
    %769 = vmatprep.subr.mxu0 0.0
    %770 = vmatpush1.msra.mxu0 0.0
    %771 = vmatprep.subr.mxu0 0.0
    %772 = vmatpush1.msra.mxu0 0.0
    %773 = vmatprep.subr.mxu0 0.0
    %774 = vmatpush1.msra.mxu0 0.0
    %775 = vmatprep.subr.mxu0 0.0
    %776 = vmatpush1.msra.mxu0 0.0
    %777 = vmatprep.mubr.f32.mxu0 0.0
    %778 = vmatmul.mubr.f32.gmra.mrb[0].mxu0 %v498
    %v779 = vpop.f32.mrb[0].mxu0
    %v780 = vadd.f32 %v494, %v779
    %v781 = vpop.f32.mrb[0].mxu0
    %v782 = vadd.f32 %v494, %v781
    %783 = vdwg.mxu0
    %v784 = vxor.u32 %v567, 2147483648
    %v785 = vxor.u32 %v569, 2147483648
    %v786 = vxor.u32 %v638, 2147483648
    %v787 = vxor.u32 %v640, 2147483648
    %v788 = vxor.u32 %v709, 2147483648
    %v789 = vxor.u32 %v711, 2147483648
    %v790 = vxor.u32 %v780, 2147483648
    %v791 = vxor.u32 %v782, 2147483648
    %v792 = vmul.f32 %v784, 1.442695
    %v793 = vpow.pop %v792
    %v794 = vmul.f32 %v785, 1.442695
    %v795 = vpow.pop %v794
    %v796 = vmul.f32 %v786, 1.442695
    %v797 = vpow.pop %v796
    %v798 = vmul.f32 %v787, 1.442695
    %v799 = vpow.pop %v798
    %v800 = vmul.f32 %v788, 1.442695
    %v801 = vpow.pop %v800
    %v802 = vmul.f32 %v789, 1.442695
    %v803 = vpow.pop %v802
    %v804 = vmul.f32 %v790, 1.442695
    %v805 = vpow.pop %v804
    %v806 = vmul.f32 %v791, 1.442695
    %v807 = vpow.pop %v806
    %v808 = vadd.f32 %v793, 1.0
    %v809 = vadd.f32 %v795, 1.0
    %v810 = vadd.f32 %v797, 1.0
    %v811 = vadd.f32 %v799, 1.0
    %v812 = vadd.f32 %v801, 1.0
    %v813 = vadd.f32 %v803, 1.0
    %v814 = vadd.f32 %v805, 1.0
    %v815 = vadd.f32 %v807, 1.0
    %v816 = vrcp.pop %v808
    %v817 = vmul.f32 1.0, %v816
    %v818 = vrcp.pop %v809
    %v819 = vmul.f32 1.0, %v818
    %v820 = vrcp.pop %v810
    %v821 = vmul.f32 1.0, %v820
    %v822 = vrcp.pop %v811
    %v823 = vmul.f32 1.0, %v822
    %v824 = vrcp.pop %v812
    %v825 = vmul.f32 1.0, %v824
    %v826 = vrcp.pop %v813
    %v827 = vmul.f32 1.0, %v826
    %v828 = vrcp.pop %v814
    %v829 = vmul.f32 1.0, %v828
    %v830 = vrcp.pop %v815
    %v831 = vmul.f32 1.0, %v830
    %v832 = vld [vmem:[%s5] sm:$0xff]
    %834 = vset.pattern.permute.xlu0 0
    %835 = vperm.xlu0 %834, %v832
    %v836 = vpop.permute.xlu0 %835
    %v838 = vmul.f32 %v817, %v836
    %v839 = vmul.f32 %v819, %v836
    %v840 = vmul.f32 %v821, %v836
    %v841 = vmul.f32 %v823, %v836
    %v842 = vmul.f32 %v825, %v836
    %v843 = vmul.f32 %v827, %v836
    %v844 = vmul.f32 %v829, %v836
    %v845 = vmul.f32 %v831, %v836
    %v846 = vld [vmem:[%s6] sm:$0xff]
    %848 = vset.pattern.permute.xlu0 0
    %849 = vperm.xlu0 %848, %v846
    %v850 = vpop.permute.xlu0 %849
    %v852 = vadd.f32 %v838, %v850
    %v853 = vadd.f32 %v839, %v850
    %v854 = vadd.f32 %v840, %v850
    %v855 = vadd.f32 %v841, %v850
    %v856 = vadd.f32 %v842, %v850
    %v857 = vadd.f32 %v843, %v850
    %v858 = vadd.f32 %v844, %v850
    %v859 = vadd.f32 %v845, %v850
    %860 = vst [vmem:[#allocation2] sm:$0xff] %v852
    %861 = vst [vmem:[#allocation2 + $0x8] sm:$0xff] %v853
    %862 = vst [vmem:[#allocation2 + $0x10] sm:$0xff] %v854
    %863 = vst [vmem:[#allocation2 + $0x18] sm:$0xff] %v855
    %864 = vst [vmem:[#allocation2 + $0x20] sm:$0xff] %v856
    %865 = vst [vmem:[#allocation2 + $0x28] sm:$0xff] %v857
    %866 = vst [vmem:[#allocation2 + $0x30] sm:$0xff] %v858
    %867 = vst [vmem:[#allocation2 + $0x38] sm:$0xff] %v859
    // Predicated region
    $region30: #{tpu_custom_call.1} parent=1 // pred_check
      _
    $region31: #{tpu_custom_call.1} parent=1 // pred_check_branch
      %869 = sbr.rel (0) target = $region33
    $region32: #{tpu_custom_call.1} parent=1 // pred_region
      %s871 = ssub.s32 1024, 1024
      %872 = vsyncadd [#allocation3], %s871
      %s874 = sshll.u32 [#allocation2], 4
      %s875 = int_to_ptr.vmem [resolvable:$true] %s874
      %877 = dma.vmem_to_hbm [thread:$0]  %s875, 1024, %s7, [#allocation3]
    $region33: #{tpu_custom_call.1} parent=1 // pred_fallthru
      _
    // Predicated region
    $region34: #{tpu_custom_call.1} parent=1 // pred_check
      _
    $region35: #{tpu_custom_call.1} parent=1 // pred_check_branch
      %879 = sbr.rel (0) target = $region37
    $region36: #{tpu_custom_call.1} parent=1 // pred_region
      %880 = dma.done [#allocation3], 1024
    $region37: #{tpu_custom_call.1} parent=1 // pred_fallthru
      _
    %881 = vsyncpa [#allocation3], 1

</llo_original>
